<compile_context>
chip_gen: v6e
topology: v6e:2x2x1
jax: 0.10.0
libtpu: 0.0.40
codegen_flags: <defaults>
</compile_context>

<pallas_src>
import functools

import jax
import jax.numpy as jnp
from jax.experimental import pallas as pl
from jax.experimental.pallas import tpu as pltpu


def _cdiv(a, b):
    return (a + b - 1) // b


def _round_up(a, b):
    return _cdiv(a, b) * b


def _layernorm_ncl_kernel(x_ref, gamma_ref, beta_ref, o_ref, *, epsilon, hidden):
    # x block: (TB, H, TL). H sits on the sublane axis, L on the lane axis, so
    # each normalization group (fixed batch row, fixed lane column) is a
    # sublane reduction and loads/stores are lane-dense.
    # NOTE: partial tail blocks (lanes or batch rows) may compute rsqrt on
    # padded/garbage values; this is benign because the reduction is along H
    # (axis=1) only and the partial store is masked/clamped -- do not change
    # the reduction to run across lanes or batch rows.
    x = x_ref[...].astype(jnp.float32)                          # (TB, H, TL)
    # Constant-reciprocal multiplies instead of divides (free; shortens chain).
    mean = jnp.sum(x, axis=1, keepdims=True) * (1.0 / hidden)   # (TB, 1, TL)
    diff = x - mean
    # torch.var default is unbiased (ddof=1) -> matches the module's forward.
    var = jnp.sum(diff * diff, axis=1, keepdims=True) * (1.0 / max(hidden - 1, 1))
    inv = jax.lax.rsqrt(var + epsilon)                          # EUP rsqrt
    g = gamma_ref[...].astype(jnp.float32)                      # (H, 1) broadcasts over (TB, H, TL)
    b = beta_ref[...].astype(jnp.float32)
    o_ref[...] = (g * (diff * inv) + b).astype(o_ref.dtype)


def _vmem_capacity_bytes():
    """Physical VMEM per core (128 MiB v5e/v6e, 64 MiB v7x); safe fallback."""
    try:
        return int(pltpu.get_tpu_info().vmem_capacity_bytes)
    except Exception:
        return 64 * 1024 * 1024   # conservative: assume v7x-sized VMEM


def _choose_tiles(B, H, L, itemsize, vmem_limit_bytes, min_step_bytes):
    """Pick (TB, TL): lane tile is a multiple of 128 (or full L), batch tile
    grows only when the per-step block is tiny, within the VMEM budget."""
    # Per-step element budget: 2x double-buffered in + out blocks (itemsize
    # each) plus ~4 f32 temporaries inside the body.
    elem_budget = max(8 * 128, vmem_limit_bytes // (4 * itemsize + 16))

    # ---- lane (L) tile -----------------------------------------------------
    if L <= 128:
        tl = L                                       # full trailing dim is always legal
    else:
        cap = max(128, (elem_budget // H) // 128 * 128)
        cap = min(cap, max(128, (L // 128) * 128))   # keep tl <= L (tail block masked)
        n_l = _cdiv(L, cap)
        tl = min(cap, _round_up(_cdiv(L, n_l), 128)) # balance so tail isn't nearly empty
    n_l = _cdiv(L, tl)

    # v7x has 2 TensorCores: make sure there are >=2 grid steps to shard.
    if B == 1 and n_l == 1 and L >= 256:
        tl = _round_up(_cdiv(L, 2), 128)
        n_l = _cdiv(L, tl)

    # ---- batch tile --------------------------------------------------------
    step_bytes = H * tl * itemsize
    tb = 1
    if B > 1 and step_bytes < min_step_bytes:
        tb = min(B, max(1, min_step_bytes // max(step_bytes, 1)))
        tb = min(tb, max(1, elem_budget // (H * tl)))
        if n_l == 1:
            tb = min(tb, max(1, (B + 1) // 2))       # leave >=2 grid steps for dual-TC
        tb = _cdiv(B, _cdiv(B, tb))                  # balance batch blocks
    return tb, tl


def layer_norm_ncl(x, gamma, beta, epsilon=1e-8, *, min_step_bytes=1 << 20):
    """x: (B, hidden, L) -> (B, hidden, L), matching the PyTorch LayerNorm module."""
    B, H, L = x.shape

    # Generation-aware VMEM cap: half of physical VMEM, at most 64 MiB.
    #   v5e/v6e (128 MiB phys) -> 64 MiB limit;  v7x (64 MiB phys) -> 32 MiB.
    vmem_limit = int(min(_vmem_capacity_bytes() // 2, 64 * 1024 * 1024))
    tb, tl = _choose_tiles(B, H, L, x.dtype.itemsize, vmem_limit, min_step_bytes)
    n_b = _cdiv(B, tb)
    n_l = _cdiv(L, tl)

    gamma2 = gamma.reshape(H, 1)
    beta2 = beta.reshape(H, 1)

    kernel = functools.partial(_layernorm_ncl_kernel, epsilon=float(epsilon), hidden=H)

    # Keep B outer / lane-tile inner: consecutive steps walk contiguous HBM
    # along the lane axis and stores stay unmasked for 128-multiple tiles.
    return pl.pallas_call(
        kernel,
        out_shape=jax.ShapeDtypeStruct((B, H, L), x.dtype),
        grid_spec=pltpu.PrefetchScalarGridSpec(
            num_scalar_prefetch=0,
            grid=(n_b, n_l),
            in_specs=[
                pl.BlockSpec((tb, H, tl), lambda b, l: (b, 0, l)),
                pl.BlockSpec((H, 1), lambda b, l: (0, 0)),
                pl.BlockSpec((H, 1), lambda b, l: (0, 0)),
            ],
            out_specs=pl.BlockSpec((tb, H, tl), lambda b, l: (b, 0, l)),
        ),
        compiler_params=pltpu.CompilerParams(
            dimension_semantics=("parallel", "parallel"),
            vmem_limit_bytes=vmem_limit,
        ),
    )(x, gamma2, beta2)


def layer_norm_ref(x, gamma, beta, epsilon=1e-8):
    """Pure-JAX reference of the PyTorch forward (unbiased variance, ddof=1)."""
    xp = jnp.transpose(x, (0, 2, 1)).astype(jnp.float32)
    mean = jnp.mean(xp, axis=-1, keepdims=True)
    var = jnp.var(xp, axis=-1, keepdims=True, ddof=1)
    y = (xp - mean) / jnp.sqrt(var + epsilon)
    y = gamma * y + beta
    return jnp.transpose(y, (0, 2, 1)).astype(x.dtype)


if __name__ == "__main__":
    key = jax.random.PRNGKey(0)

    def check(B, H, L, use_default_params):
        kx, kg, kb = jax.random.split(jax.random.fold_in(key, B * 100003 + L), 3)
        x = jax.random.normal(kx, (B, H, L), dtype=jnp.float32)
        if use_default_params:
            # matches nn.Parameter(torch.zeros/ones(hidden_size)) init
            beta = jnp.zeros((H,), dtype=jnp.float32)
            gamma = jnp.ones((H,), dtype=jnp.float32)
        else:
            gamma = 1.0 + 0.1 * jax.random.normal(kg, (H,), dtype=jnp.float32)
            beta = 0.1 * jax.random.normal(kb, (H,), dtype=jnp.float32)
        out = jax.block_until_ready(layer_norm_ncl(x, gamma, beta, epsilon=1e-8))
        ref = layer_norm_ref(x, gamma, beta, epsilon=1e-8)
        assert out.shape == x.shape
        assert jnp.allclose(out, ref, atol=1e-5, rtol=1e-5), (B, H, L)

    # small shape implied by the module (batch=2, hidden=32, seq=8)
    check(2, 32, 8, use_default_params=True)
    # multi-block lane grid, 128-aligned lane tiles (unmasked stores)
    check(2, 32, 384, use_default_params=False)
    # non-divisible seq length -> masked partial lane tail block
    check(3, 32, 200, use_default_params=False)
    # B==1: lane axis is split so the grid has >=2 steps (dual-TC on v7x)
    check(1, 32, 512, use_default_params=False)
    # batch tiling path with a partial batch block (TB=3 over B=5)
    check(5, 32, 8, use_default_params=False)

    print("KERNEL_OK")
</pallas_src>

<mosaic_0001>
module attributes {stable_mosaic.version = 11 : i64} {
  func.func @_layernorm_ncl_kernel(%arg0: i32, %arg1: i32, %arg2: memref<1x32x8xf32, #tpu.memory_space<vmem>>, %arg3: memref<32x1xf32, #tpu.memory_space<vmem>>, %arg4: memref<32x1xf32, #tpu.memory_space<vmem>>, %arg5: memref<1x32x8xf32, #tpu.memory_space<vmem>>) attributes {dimension_semantics = [#tpu.dimension_semantics<parallel>, #tpu.dimension_semantics<parallel>], iteration_bounds = array<i64: 2, 1>, scalar_prefetch = 0 : i64, scratch_operands = 0 : i64, tpu.core_type = #tpu.core_type<tc>, window_params = [{transform_indices = @transform_0, window_bounds = array<i64: 1, 32, 8>}, {pipeline_mode = #tpu.pipeline_mode<synchronous>, transform_indices = @transform_1, window_bounds = array<i64: 32, 1>}, {pipeline_mode = #tpu.pipeline_mode<synchronous>, transform_indices = @transform_2, window_bounds = array<i64: 32, 1>}, {transform_indices = @transform_3, window_bounds = array<i64: 1, 32, 8>}]} {
    %c0 = arith.constant 0 : index
    %c0_0 = arith.constant 0 : index
    %c0_1 = arith.constant 0 : index
    %0 = vector.load %arg2[%c0, %c0_0, %c0_1] : memref<1x32x8xf32, #tpu.memory_space<vmem>>, vector<1x32x8xf32>
    %cst = arith.constant dense<0.000000e+00> : vector<1x8xf32>
    %1 = vector.multi_reduction <add>, %0, %cst [1] : vector<1x32x8xf32> to vector<1x8xf32>
    %2 = vector.shape_cast %1 : vector<1x8xf32> to vector<1x1x8xf32>
    %cst_2 = arith.constant 3.125000e-02 : f32
    %3 = vector.broadcast %cst_2 : f32 to vector<1x1x8xf32>
    %4 = arith.mulf %2, %3 : vector<1x1x8xf32>
    %5 = vector.broadcast %4 : vector<1x1x8xf32> to vector<1x32x8xf32>
    %6 = arith.subf %0, %5 : vector<1x32x8xf32>
    %7 = arith.mulf %6, %6 : vector<1x32x8xf32>
    %cst_3 = arith.constant dense<0.000000e+00> : vector<1x8xf32>
    %8 = vector.multi_reduction <add>, %7, %cst_3 [1] : vector<1x32x8xf32> to vector<1x8xf32>
    %9 = vector.shape_cast %8 : vector<1x8xf32> to vector<1x1x8xf32>
    %cst_4 = arith.constant 0.0322580636 : f32
    %10 = vector.broadcast %cst_4 : f32 to vector<1x1x8xf32>
    %11 = arith.mulf %9, %10 : vector<1x1x8xf32>
    %cst_5 = arith.constant 9.99999993E-9 : f32
    %12 = vector.broadcast %cst_5 : f32 to vector<1x1x8xf32>
    %13 = arith.addf %11, %12 : vector<1x1x8xf32>
    %14 = math.rsqrt %13 : vector<1x1x8xf32>
    %c0_6 = arith.constant 0 : index
    %c0_7 = arith.constant 0 : index
    %15 = vector.load %arg3[%c0_6, %c0_7] : memref<32x1xf32, #tpu.memory_space<vmem>>, vector<32x1xf32>
    %c0_8 = arith.constant 0 : index
    %c0_9 = arith.constant 0 : index
    %16 = vector.load %arg4[%c0_8, %c0_9] : memref<32x1xf32, #tpu.memory_space<vmem>>, vector<32x1xf32>
    %17 = vector.broadcast %14 : vector<1x1x8xf32> to vector<1x32x8xf32>
    %18 = arith.mulf %6, %17 : vector<1x32x8xf32>
    %19 = vector.shape_cast %15 : vector<32x1xf32> to vector<1x32x1xf32>
    %20 = vector.broadcast %19 : vector<1x32x1xf32> to vector<1x32x8xf32>
    %21 = arith.mulf %20, %18 : vector<1x32x8xf32>
    %22 = vector.shape_cast %16 : vector<32x1xf32> to vector<1x32x1xf32>
    %23 = vector.broadcast %22 : vector<1x32x1xf32> to vector<1x32x8xf32>
    %24 = arith.addf %21, %23 : vector<1x32x8xf32>
    %c0_10 = arith.constant 0 : index
    %c0_11 = arith.constant 0 : index
    %c0_12 = arith.constant 0 : index
    %25 = vector.load %arg5[%c0_10, %c0_11, %c0_12] : memref<1x32x8xf32, #tpu.memory_space<vmem>>, vector<1x32x8xf32>
    tpu.vector_store %arg5[%c0_10, %c0_11, %c0_12], %24 {strides = array<i32>} : memref<1x32x8xf32, #tpu.memory_space<vmem>>, vector<1x32x8xf32>,
    return
  }
  func.func @transform_0(%arg0: i32, %arg1: i32) -> (i32, i32, i32) {
    %c0_i32 = arith.constant 0 : i32
    %c0_i32_0 = arith.constant 0 : i32
    return %arg0, %c0_i32, %arg1 : i32, i32, i32
  }
  func.func @transform_1(%arg0: i32, %arg1: i32) -> (i32, i32) {
    %c0_i32 = arith.constant 0 : i32
    %c0_i32_0 = arith.constant 0 : i32
    %c0_i32_1 = arith.constant 0 : i32
    return %c0_i32, %c0_i32_0 : i32, i32
  }
  func.func @transform_2(%arg0: i32, %arg1: i32) -> (i32, i32) {
    %c0_i32 = arith.constant 0 : i32
    %c0_i32_0 = arith.constant 0 : i32
    %c0_i32_1 = arith.constant 0 : i32
    return %c0_i32, %c0_i32_0 : i32, i32
  }
  func.func @transform_3(%arg0: i32, %arg1: i32) -> (i32, i32, i32) {
    %c0_i32 = arith.constant 0 : i32
    %c0_i32_0 = arith.constant 0 : i32
    return %arg0, %c0_i32, %arg1 : i32, i32, i32
  }
}

</mosaic_0001>

<llo_original>
// kernel: tpu_custom_call.1
$region0: #{tpu_custom_call.1}
  #allocation0 [shape = 'u32[]', space=smem, size = 0x4, offset = 0x4, fixed_abs, tag = 'smem constant byte address 0x4 - core index']
  #allocation1 [shape = 'u32[144,128]{1,0:T(1,128)}', space=vmem, size = 0x12000, scoped, tag = 'internal scratch']
  %s0 = inlined_call_operand.vmem [shape: f32[2,32,8], index: 0, kind: input, shape index: {}]
  %s1 = inlined_call_operand.vmem [shape: f32[32,1], index: 1, kind: input, shape index: {}]
  %s2 = inlined_call_operand.vmem [shape: f32[32,1], index: 2, kind: input, shape index: {}]
  %s3 = inlined_call_operand.vmem [shape: f32[2,32,8], index: 3, kind: output, shape index: {}]
  %s4 = sld [smem:[#allocation0]]
  $region45: #{tpu_custom_call.1} parent=0
    _
  %s6 = ssub.s32 1, %s4
  %s7 = scalar_select 0, %s6, %s4
  loop: start=0, step=1, limit=4
  $region2: #{tpu_custom_call.1} parent=0 // loop_pre_header
    _
  $region3: #{tpu_custom_call.1} parent=0 // loop_header
    %s9 = sphi 0, %s13
    %p10 = scmp.ge.s32.totalorder %s9, 4
    %s16 = sphi 0, %s28
    %s17 = sphi 0, %s24
    %s18 = sphi 0, %s16
    %s19 = sphi 0, %s17
    %s20 = sphi 0, %s18
    %s21 = sphi 0, %s19
    %s33 = sphi 0, %s35
    %s36 = sphi 0, %s33
    %s37 = sphi 0, %s36
    %s53 = sphi 0, %s37
    %s57 = sphi 0, %s57
    %s59 = sphi 0, %s57
    %s60 = sphi 0, %s59
    %s74 = sphi 0, %s60
    %s78 = sphi 0, %s78
    %s80 = sphi 0, %s78
    %s81 = sphi 0, %s80
    %s95 = sphi 0, %s81
    %s103 = sphi 0, %s105
    %s106 = sphi 0, %s103
    %s107 = sphi 0, %s106
    %s123 = sphi 0, %s107
  $region4: #{tpu_custom_call.1} parent=0 // loop_header_branch
    %12 = sbr.rel (%p10) target = $region8
  $region5: #{tpu_custom_call.1} parent=0 // loop_body
    %s14 = ssub.s32 %s9, 1
    %s15 = ssub.s32 %s9, 2
    %s22 = sadd.s32 1, %s17
    %p23 = scmp.ge.s32.totalorder %s22, 1
    %s24 = scalar_select %p23, 0, %s22
    %s25 = sadd.s32 1, %s16
    %s26 = scalar_select %p23, %s25, %s16
    %p27 = scmp.ge.s32.totalorder %s26, 2
    %s28 = scalar_select %p27, 0, %s26
    %s29 = ssub.s32 %s16, %s28
    %s30 = ssub.s32 %s17, %s24
    %s31 = sor.u32 %s29, %s30
    %p32 = scmp.eq.s32.totalorder %s31, 0
    %s34 = sadd.s32 %s33, 1
    %s35 = scalar_select %p32, %s33, %s34
    %p38 = pneg %p32
    %p39 = scmp.eq.s32.totalorder %s9, 1
    %p40 = por %p38, %p39
    %p41 = scmp.ne.s32.totalorder %s33, %s36
    %p42 = scmp.eq.s32.totalorder %s9, 0
    %p43 = por %p41, %p42
    %p44 = scmp.ne.s32.totalorder %s33, %s36
    %p45 = scmp.eq.s32.totalorder %s14, 1
    %p46 = por %p44, %p45
    %p47 = scmp.ne.s32.totalorder %s36, %s37
    %p48 = scmp.eq.s32.totalorder %s14, 0
    %p49 = por %p47, %p48
    %p50 = scmp.ne.s32.totalorder %s36, %s37
    %p51 = scmp.eq.s32.totalorder %s15, 1
    %p52 = por %p50, %p51
    %p54 = scmp.ne.s32.totalorder %s37, %s53
    %p55 = scmp.eq.s32.totalorder %s15, 0
    %p56 = por %p54, %p55
    %s58 = sadd.s32 %s57, 1
    %p61 = scmp.eq.s32.totalorder %s9, 1
    %p62 = scmp.ne.s32.totalorder %s57, %s59
    %p63 = scmp.eq.s32.totalorder %s9, 0
    %p64 = por %p62, %p63
    %p65 = scmp.ne.s32.totalorder %s57, %s59
    %p66 = scmp.eq.s32.totalorder %s14, 1
    %p67 = por %p65, %p66
    %p68 = scmp.ne.s32.totalorder %s59, %s60
    %p69 = scmp.eq.s32.totalorder %s14, 0
    %p70 = por %p68, %p69
    %p71 = scmp.ne.s32.totalorder %s59, %s60
    %p72 = scmp.eq.s32.totalorder %s15, 1
    %p73 = por %p71, %p72
    %p75 = scmp.ne.s32.totalorder %s60, %s74
    %p76 = scmp.eq.s32.totalorder %s15, 0
    %p77 = por %p75, %p76
    %s79 = sadd.s32 %s78, 1
    %p82 = scmp.eq.s32.totalorder %s9, 1
    %p83 = scmp.ne.s32.totalorder %s78, %s80
    %p84 = scmp.eq.s32.totalorder %s9, 0
    %p85 = por %p83, %p84
    %p86 = scmp.ne.s32.totalorder %s78, %s80
    %p87 = scmp.eq.s32.totalorder %s14, 1
    %p88 = por %p86, %p87
    %p89 = scmp.ne.s32.totalorder %s80, %s81
    %p90 = scmp.eq.s32.totalorder %s14, 0
    %p91 = por %p89, %p90
    %p92 = scmp.ne.s32.totalorder %s80, %s81
    %p93 = scmp.eq.s32.totalorder %s15, 1
    %p94 = por %p92, %p93
    %p96 = scmp.ne.s32.totalorder %s81, %s95
    %p97 = scmp.eq.s32.totalorder %s15, 0
    %p98 = por %p96, %p97
    %s99 = ssub.s32 %s16, %s28
    %s100 = ssub.s32 %s17, %s24
    %s101 = sor.u32 %s99, %s100
    %p102 = scmp.eq.s32.totalorder %s101, 0
    %s104 = sadd.s32 %s103, 1
    %s105 = scalar_select %p102, %s103, %s104
    %p108 = pneg %p102
    %p109 = scmp.eq.s32.totalorder %s9, 1
    %p110 = por %p108, %p109
    %p111 = scmp.ne.s32.totalorder %s103, %s106
    %p112 = scmp.eq.s32.totalorder %s9, 0
    %p113 = por %p111, %p112
    %p114 = scmp.ne.s32.totalorder %s103, %s106
    %p115 = scmp.eq.s32.totalorder %s14, 1
    %p116 = por %p114, %p115
    %p117 = scmp.ne.s32.totalorder %s106, %s107
    %p118 = scmp.eq.s32.totalorder %s14, 0
    %p119 = por %p117, %p118
    %p120 = scmp.ne.s32.totalorder %s106, %s107
    %p121 = scmp.eq.s32.totalorder %s15, 1
    %p122 = por %p120, %p121
    %p124 = scmp.ne.s32.totalorder %s107, %s123
    %p125 = scmp.eq.s32.totalorder %s15, 0
    %p126 = por %p124, %p125
    %p127 = scmp.le.s32.totalorder 1, %s9
    %p128 = scmp.lt.s32.totalorder %s9, 3
    %p129 = pnand %p127, %p128
    %p130 = pneg %p129
    // Predicated region
    $region9: #{tpu_custom_call.1} parent=5 // pred_check
      _
    $region10: #{tpu_custom_call.1} parent=5 // pred_check_branch
      %132 = sbr.rel (%p129) target = $region12
    $region11: #{tpu_custom_call.1} parent=5 // pred_region
      %s133 = ssub.s32 %s9, 1
      // Predicated region
      $region13: #{tpu_custom_call.1} parent=11 // pred_check
        %p134 = pneg %p70
      $region14: #{tpu_custom_call.1} parent=11 // pred_check_branch
        %136 = sbr.rel (%p134) target = $region16
      $region15: #{tpu_custom_call.1} parent=11 // pred_region
        _
      $region16: #{tpu_custom_call.1} parent=11 // pred_fallthru
        _
      // Predicated region
      $region17: #{tpu_custom_call.1} parent=11 // pred_check
        %p137 = pneg %p91
      $region18: #{tpu_custom_call.1} parent=11 // pred_check_branch
        %139 = sbr.rel (%p137) target = $region20
      $region19: #{tpu_custom_call.1} parent=11 // pred_region
        _
      $region20: #{tpu_custom_call.1} parent=11 // pred_fallthru
        _
    $region12: #{tpu_custom_call.1} parent=5 // pred_fallthru
      _
    %p140 = scmp.lt.s32.totalorder %s9, 2
    // Predicated region
    $region21: #{tpu_custom_call.1} parent=5 // pred_check
      %p141 = pneg %p140
    $region22: #{tpu_custom_call.1} parent=5 // pred_check_branch
      %143 = sbr.rel (%p141) target = $region24
    $region23: #{tpu_custom_call.1} parent=5 // pred_region
      // Predicated region
      $region25: #{tpu_custom_call.1} parent=23 // pred_check
        %p144 = pneg %p43
      $region26: #{tpu_custom_call.1} parent=23 // pred_check_branch
        %146 = sbr.rel (%p144) target = $region28
      $region27: #{tpu_custom_call.1} parent=23 // pred_region
        %p147 = scmp.lt.s32.totalorder %s16, 1
        %s148 = scalar_select %p147, %s16, 1
        %p149 = scmp.lt.s32.totalorder %s17, 0
        %s150 = scalar_select %p149, %s17, 0
        %s151 = smul.addr %s148, 4
        %s152 = sadd.s32 %s150, %s151
        %s153 = smul.addr %s152, 8
        %s154 = scalar_lea.vmem %s0, %s153
      $region28: #{tpu_custom_call.1} parent=23 // pred_fallthru
        _
    $region24: #{tpu_custom_call.1} parent=5 // pred_fallthru
      _
    %p155 = scmp.le.s32.totalorder 1, %s9
    %p156 = scmp.lt.s32.totalorder %s9, 3
    %p157 = pnand %p155, %p156
    %p158 = pneg %p157
    // Predicated region
    $region29: #{tpu_custom_call.1} parent=5 // pred_check
      _
    $region30: #{tpu_custom_call.1} parent=5 // pred_check_branch
      %160 = sbr.rel (%p157) target = $region32
    $region31: #{tpu_custom_call.1} parent=5 // pred_region
      %s161 = ssub.s32 %s9, 1
      %p162 = scmp.lt.s32.totalorder %s18, 1
      %s163 = scalar_select %p162, %s18, 1
      %p164 = scmp.lt.s32.totalorder %s19, 0
      %s165 = scalar_select %p164, %s19, 0
      %s166 = smul.addr %s163, 4
      %s167 = sadd.s32 %s165, %s166
      %s168 = smul.addr %s167, 8
      %s169 = scalar_lea.vmem %s0, %s168
      %p170 = pneg %p49
      %p171 = pneg %p46
      %p172 = pneg %p70
      %p173 = pneg %p67
      %p174 = pneg %p91
      %p175 = pneg %p88
      %p176 = pneg %p119
      %p177 = pneg %p116
      %p178 = scmp.lt.s32.totalorder %s18, 1
      %s179 = scalar_select %p178, %s18, 1
      %p180 = scmp.lt.s32.totalorder %s19, 0
      %s181 = scalar_select %p180, %s19, 0
      %s182 = smul.addr %s179, 4
      %s183 = sadd.s32 %s181, %s182
      %s184 = smul.addr %s183, 8
      %s185 = scalar_lea.vmem %s3, %s184
      %p186 = scmp.lt.s32.totalorder %s18, 1
      %s187 = scalar_select %p186, %s18, 1
      %p188 = scmp.lt.s32.totalorder %s19, 0
      %s189 = scalar_select %p188, %s19, 0
      %s190 = smul.addr %s187, 4
      %s191 = sadd.s32 %s189, %s190
      %s192 = smul.addr %s191, 8
      %s193 = scalar_lea.vmem %s0, %s192
      %p194 = scmp.lt.s32.totalorder %s18, 1
      %s195 = scalar_select %p194, %s18, 1
      %p196 = scmp.lt.s32.totalorder %s19, 0
      %s197 = scalar_select %p196, %s19, 0
      %s198 = smul.addr %s195, 4
      %s199 = sadd.s32 %s197, %s198
      %s200 = smul.addr %s199, 8
      %s201 = scalar_lea.vmem %s3, %s200
      %v202 = vld [vmem:[%s193] sm:$0xff]
      %v203 = vld [vmem:[%s193 + $0x8] sm:$0xff]
      %v204 = vld [vmem:[%s193 + $0x10] sm:$0xff]
      %v205 = vld [vmem:[%s193 + $0x18] sm:$0xff]
      %vm206 = vcmask 64512
      %v207 = vsel %vm206, %v202, 0.0
      %v208 = vsel %vm206, %v203, 0.0
      %v209 = vadd.f32 %v207, %v208
      %v210 = vsel %vm206, %v204, 0.0
      %v211 = vadd.f32 %v209, %v210
      %v212 = vsel %vm206, %v205, 0.0
      %v213 = vadd.f32 %v211, %v212
      %v214 = vrot.slane %v213, 4
      %v215 = vadd.f32 %v213, %v214
      %v216 = vrot.slane %v215, 2
      %v217 = vadd.f32 %v215, %v216
      %v218 = vrot.slane %v217, 1
      %v219 = vadd.f32 %v217, %v218
      %v220 = vmul.f32 %v219, 0.03125
      %v221 = vsub.f32 %v202, %v220
      %v222 = vsub.f32 %v203, %v220
      %v223 = vsub.f32 %v204, %v220
      %v224 = vsub.f32 %v205, %v220
      %v225 = vmul.f32 %v221, %v221
      %v226 = vmul.f32 %v222, %v222
      %v227 = vmul.f32 %v223, %v223
      %v228 = vmul.f32 %v224, %v224
      %v229 = vsel %vm206, %v225, 0.0
      %v230 = vsel %vm206, %v226, 0.0
      %v231 = vadd.f32 %v229, %v230
      %v232 = vsel %vm206, %v227, 0.0
      %v233 = vadd.f32 %v231, %v232
      %v234 = vsel %vm206, %v228, 0.0
      %v235 = vadd.f32 %v233, %v234
      %v236 = vrot.slane %v235, 4
      %v237 = vadd.f32 %v235, %v236
      %v238 = vrot.slane %v237, 2
      %v239 = vadd.f32 %v237, %v238
      %v240 = vrot.slane %v239, 1
      %v241 = vadd.f32 %v239, %v240
      %v242 = vmul.f32 %v241, 0.032258064
      %v243 = vadd.f32 %v242, 1e-08
      %v244 = vrsqrt.pop %v243
      %v245 = vld [vmem:[%s1] sm:$0xff]
      %v246 = vld [vmem:[%s1 + $0x8] sm:$0xff]
      %v247 = vld [vmem:[%s1 + $0x10] sm:$0xff]
      %v248 = vld [vmem:[%s1 + $0x18] sm:$0xff]
      %v249 = vld [vmem:[%s2] sm:$0xff]
      %v250 = vld [vmem:[%s2 + $0x8] sm:$0xff]
      %v251 = vld [vmem:[%s2 + $0x10] sm:$0xff]
      %v252 = vld [vmem:[%s2 + $0x18] sm:$0xff]
      %v253 = vmul.f32 %v221, %v244
      %v254 = vmul.f32 %v222, %v244
      %v255 = vmul.f32 %v223, %v244
      %v256 = vmul.f32 %v224, %v244
      %258 = vset.pattern.permute.xlu0 0
      %259 = vperm.xlu0 %258, %v245
      %v260 = vpop.permute.xlu0 %259
      %263 = vset.pattern.permute.xlu0 0
      %264 = vperm.xlu0 %263, %v246
      %v265 = vpop.permute.xlu0 %264
      %268 = vset.pattern.permute.xlu0 0
      %269 = vperm.xlu0 %268, %v247
      %v270 = vpop.permute.xlu0 %269
      %273 = vset.pattern.permute.xlu0 0
      %274 = vperm.xlu0 %273, %v248
      %v275 = vpop.permute.xlu0 %274
      %v277 = vmul.f32 %v260, %v253
      %v278 = vmul.f32 %v265, %v254
      %v279 = vmul.f32 %v270, %v255
      %v280 = vmul.f32 %v275, %v256
      %282 = vset.pattern.permute.xlu0 0
      %283 = vperm.xlu0 %282, %v249
      %v284 = vpop.permute.xlu0 %283
      %287 = vset.pattern.permute.xlu0 0
      %288 = vperm.xlu0 %287, %v250
      %v289 = vpop.permute.xlu0 %288
      %292 = vset.pattern.permute.xlu0 0
      %293 = vperm.xlu0 %292, %v251
      %v294 = vpop.permute.xlu0 %293
      %297 = vset.pattern.permute.xlu0 0
      %298 = vperm.xlu0 %297, %v252
      %v299 = vpop.permute.xlu0 %298
      %v301 = vadd.f32 %v277, %v284
      %v302 = vadd.f32 %v278, %v289
      %v303 = vadd.f32 %v279, %v294
      %v304 = vadd.f32 %v280, %v299
      %305 = vst.msk [vmem:[%s201] sm:$0xff] %vm206, %v301
      %306 = vst.msk [vmem:[%s201 + $0x8] sm:$0xff] %vm206, %v302
      %307 = vst.msk [vmem:[%s201 + $0x10] sm:$0xff] %vm206, %v303
      %308 = vst.msk [vmem:[%s201 + $0x18] sm:$0xff] %vm206, %v304
      %p309 = scmp.lt.s32.totalorder %s18, 1
      %s310 = scalar_select %p309, %s18, 1
      %p311 = scmp.lt.s32.totalorder %s19, 0
      %s312 = scalar_select %p311, %s19, 0
      %s313 = smul.addr %s310, 4
      %s314 = sadd.s32 %s312, %s313
      %s315 = smul.addr %s314, 8
      %s316 = scalar_lea.vmem %s3, %s315
      // Predicated region
      $region33: #{tpu_custom_call.1} parent=31 // pred_check
        %p317 = pneg %p116
      $region34: #{tpu_custom_call.1} parent=31 // pred_check_branch
        %319 = sbr.rel (%p317) target = $region36
      $region35: #{tpu_custom_call.1} parent=31 // pred_region
        _
      $region36: #{tpu_custom_call.1} parent=31 // pred_fallthru
        _
    $region32: #{tpu_custom_call.1} parent=5 // pred_fallthru
      _
    %p320 = scmp.le.s32.totalorder 2, %s9
    // Predicated region
    $region37: #{tpu_custom_call.1} parent=5 // pred_check
      %p321 = pneg %p320
    $region38: #{tpu_custom_call.1} parent=5 // pred_check_branch
      %323 = sbr.rel (%p321) target = $region40
    $region39: #{tpu_custom_call.1} parent=5 // pred_region
      %s324 = ssub.s32 %s9, 2
      // Predicated region
      $region41: #{tpu_custom_call.1} parent=39 // pred_check
        %p325 = pneg %p122
      $region42: #{tpu_custom_call.1} parent=39 // pred_check_branch
        %327 = sbr.rel (%p325) target = $region44
      $region43: #{tpu_custom_call.1} parent=39 // pred_region
        %p328 = scmp.lt.s32.totalorder %s20, 1
        %s329 = scalar_select %p328, %s20, 1
        %p330 = scmp.lt.s32.totalorder %s21, 0
        %s331 = scalar_select %p330, %s21, 0
        %s332 = smul.addr %s329, 4
        %s333 = sadd.s32 %s331, %s332
        %s334 = smul.addr %s333, 8
        %s335 = scalar_lea.vmem %s3, %s334
      $region44: #{tpu_custom_call.1} parent=39 // pred_fallthru
        _
    $region40: #{tpu_custom_call.1} parent=5 // pred_fallthru
      _
  $region6: #{tpu_custom_call.1} parent=0 // loop_footer
    %s13 = sadd.s32 1, %s9
  $region7: #{tpu_custom_call.1} parent=0 // loop_footer_branch
    %8 = sbr.rel target = $region3
  $region8: #{tpu_custom_call.1} parent=0 // loop_exit
    _

</llo_original>
